<compile_context>
chip_gen: v5e
topology: v5e:2x2
jax: 0.10.0
libtpu: 0.0.40
codegen_flags: <defaults>
</compile_context>

<pallas_src>
import functools

import numpy as np
import jax
import jax.numpy as jnp
from jax.experimental import pallas as pl
from jax.experimental.pallas import tpu as pltpu


def _gms_kernel(x_ref, y_ref, mask_ref, pvalid_ref, out_ref, acc_ref, *, W, HW, total):
    step = pl.program_id(0)

    @pl.when(step == 0)
    def _init():
        acc_ref[...] = jnp.zeros_like(acc_ref)

    # (1, HW) lane masks: 1.0 where the rolled-in neighbour is a real in-row
    # pixel of the same plane, 0.0 where the conv2d zero border applies.
    m_lf = mask_ref[0:1, :]   # pixel has a left  neighbour  (j > 0)
    m_rt = mask_ref[1:2, :]   # pixel has a right neighbour  (j < W-1)
    m_up = mask_ref[2:3, :]   # pixel has a row above        (i > 0)
    m_dn = mask_ref[3:4, :]   # pixel has a row below        (i < H-1)

    sh_rt = HW - 1            # lane roll by -1 expressed as a positive shift
    sh_dn = HW - W            # lane roll by -W

    def grad_sq(a):
        # a: (Pt, HW); plane p flattened row-major on lanes, A[i, j] = a[p, i*W + j].
        up = pltpu.roll(a, W, axis=1) * m_up        # A[i-1, j]  (0 at i == 0)
        dn = pltpu.roll(a, sh_dn, axis=1) * m_dn    # A[i+1, j]  (0 at i == H-1)
        lf = pltpu.roll(a, 1, axis=1) * m_lf        # A[i, j-1]  (0 at j == 0)
        rt = pltpu.roll(a, sh_rt, axis=1) * m_rt    # A[i, j+1]  (0 at j == W-1)
        r = up + a + dn                             # vertical 3-sum
        cs = lf + a + rt                            # horizontal 3-sum
        gx = pltpu.roll(r, 1, axis=1) * m_lf - pltpu.roll(r, sh_rt, axis=1) * m_rt
        gy = pltpu.roll(cs, W, axis=1) * m_up - pltpu.roll(cs, sh_dn, axis=1) * m_dn
        # Both Prewitt 1/3 scales folded into one 1/9 on the squared magnitude.
        return (gx * gx + gy * gy) * (1.0 / 9.0) + 1e-12   # == gm ** 2

    s1 = grad_sq(x_ref[...])
    s2 = grad_sq(y_ref[...])
    c = 0.0026
    gms = (2.0 * jnp.sqrt(s1 * s2) + c) / (s1 + s2 + c + 1e-12)

    # Per-plane lane reduction -> (Pt, 1); dummy (zero-padded) planes masked out.
    acc_ref[...] += jnp.sum(gms, axis=1, keepdims=True) * pvalid_ref[...]

    @pl.when(step == pl.num_programs(0) - 1)
    def _finalize():
        # mean(1 - gms) == 1 - sum(gms) / total
        out_ref[...] = jnp.broadcast_to(1.0 - jnp.sum(acc_ref[...]) / total, (1, 1))


def _plane_tiling(P, cap):
    """Pick (planes-per-step, padded plane count)."""
    if P <= cap:
        return P, P                       # single step, block == full sublane extent
    d = (cap // 8) * 8
    while d >= 8:                         # prefer a multiple-of-8 divisor of P
        if P % d == 0:
            return d, P
        d -= 8
    pt = max(8, (cap // 8) * 8)           # fall back: zero-pad the plane count
    return pt, ((P + pt - 1) // pt) * pt


def gms_loss(img1, img2, *, target_block_bytes=4 * 1024 * 1024):
    """GMSLoss.forward(img1, img2, as_loss=True) == mean(1 - gms_map)."""
    assert img1.shape == img2.shape and img1.ndim == 4
    N, C, H, W = img1.shape
    P, HW = N * C, H * W

    # Free metadata reshape: no wrapper-side pad / transpose HBM pass.
    x = img1.reshape(P, HW).astype(jnp.float32)
    y = img2.reshape(P, HW).astype(jnp.float32)

    # Block sizing from the (8, 128)-padded VMEM footprint.
    lanes_padded = pl.cdiv(HW, 128) * 128
    row_bytes = lanes_padded * 4
    cap = max(8, (target_block_bytes // row_bytes) // 8 * 8)
    Pt, P_pad = _plane_tiling(P, cap)
    steps = P_pad // Pt
    if P_pad != P:   # rare: dummy zero planes, excluded from the sum via plane_valid
        pad = jnp.zeros((P_pad - P, HW), jnp.float32)
        x = jnp.concatenate([x, pad], axis=0)
        y = jnp.concatenate([y, pad], axis=0)
    plane_valid = jnp.asarray((np.arange(P_pad) < P).astype(np.float32)[:, None])

    # Boundary masks in the flattened coordinate c = i*W + j.
    cols = np.arange(HW)
    j = cols % W
    masks = jnp.asarray(np.stack([
        (j != 0),            # has left neighbour
        (j != W - 1),        # has right neighbour
        (cols >= W),         # has row above
        (cols < HW - W),     # has row below
    ]).astype(np.float32))                                    # (4, HW)

    sub_pad = ((Pt + 7) // 8) * 8
    block_bytes = sub_pad * lanes_padded * 4
    resident = 2 * 2 * block_bytes + 2 * 24 * lanes_padded * 4   # inputs x buffers + small
    vmem_limit = int(min(100 * 2**20, max(32 * 2**20, 2 * resident)))

    kernel = functools.partial(_gms_kernel, W=W, HW=HW, total=float(P * H * W))

    out = pl.pallas_call(
        kernel,
        out_shape=jax.ShapeDtypeStruct((1, 1), jnp.float32),
        grid_spec=pltpu.PrefetchScalarGridSpec(
            num_scalar_prefetch=0,
            grid=(steps,),
            in_specs=[
                pl.BlockSpec((Pt, HW), lambda i: (i, 0)),
                pl.BlockSpec((Pt, HW), lambda i: (i, 0)),
                pl.BlockSpec((4, HW), lambda i: (0, 0)),
                pl.BlockSpec((Pt, 1), lambda i: (i, 0)),
            ],
            out_specs=pl.BlockSpec((1, 1), lambda i: (0, 0)),
            scratch_shapes=[pltpu.VMEM((Pt, 1), jnp.float32)],
        ),
        # Single reduction axis feeding one accumulator -> "arbitrary".
        compiler_params=pltpu.CompilerParams(
            dimension_semantics=("arbitrary",),
            vmem_limit_bytes=vmem_limit,
        ),
    )(x, y, masks, plane_valid)
    return out[0, 0]


def _gms_loss_reference(img1, img2):
    """Pure-JAX reference (same semantics as the PyTorch module)."""
    N, C, H, W = img1.shape
    x = jnp.pad(img1.astype(jnp.float32), ((0, 0), (0, 0), (1, 1), (1, 1)))
    y = jnp.pad(img2.astype(jnp.float32), ((0, 0), (0, 0), (1, 1), (1, 1)))

    def grad_mag(a):
        gx = (a[..., 0:H, 0:W] + a[..., 1:H + 1, 0:W] + a[..., 2:H + 2, 0:W]
              - a[..., 0:H, 2:W + 2] - a[..., 1:H + 1, 2:W + 2]
              - a[..., 2:H + 2, 2:W + 2]) / 3.0
        gy = (a[..., 0:H, 0:W] + a[..., 0:H, 1:W + 1] + a[..., 0:H, 2:W + 2]
              - a[..., 2:H + 2, 0:W] - a[..., 2:H + 2, 1:W + 1]
              - a[..., 2:H + 2, 2:W + 2]) / 3.0
        return jnp.sqrt(gx * gx + gy * gy + 1e-12)

    gm1, gm2 = grad_mag(x), grad_mag(y)
    c = 0.0026
    gms = (2.0 * gm1 * gm2 + c) / (gm1 * gm1 + gm2 * gm2 + c + 1e-12)
    return jnp.mean(1.0 - gms)


if __name__ == "__main__":
    key = jax.random.PRNGKey(0)
    k1, k2 = jax.random.split(key)
    N, C, H, W = 2, 4, 16, 16  # in_channels = 4
    img1 = jax.random.uniform(k1, (N, C, H, W), dtype=jnp.float32)
    img2 = jax.random.uniform(k2, (N, C, H, W), dtype=jnp.float32)

    loss = jax.block_until_ready(jax.jit(gms_loss)(img1, img2))
    ref = jax.block_until_ready(_gms_loss_reference(img1, img2))
    assert jnp.allclose(loss, ref, atol=1e-5, rtol=1e-5), (loss, ref)
    print("KERNEL_OK")
</pallas_src>

<mosaic_0001>
module attributes {stable_mosaic.version = 11 : i64} {
  func.func @_gms_kernel(%arg0: i32, %arg1: memref<8x256xf32, #tpu.memory_space<vmem>>, %arg2: memref<8x256xf32, #tpu.memory_space<vmem>>, %arg3: memref<4x256xf32, #tpu.memory_space<vmem>>, %arg4: memref<8x1xf32, #tpu.memory_space<vmem>>, %arg5: memref<1x1xf32, #tpu.memory_space<vmem>>, %arg6: memref<8x1xf32, #tpu.memory_space<vmem>>) attributes {dimension_semantics = [#tpu.dimension_semantics<arbitrary>], iteration_bounds = array<i64: 1>, scalar_prefetch = 0 : i64, scratch_operands = 1 : i64, tpu.core_type = #tpu.core_type<tc>, window_params = [{transform_indices = @transform_0, window_bounds = array<i64: 8, 256>}, {transform_indices = @transform_1, window_bounds = array<i64: 8, 256>}, {pipeline_mode = #tpu.pipeline_mode<synchronous>, transform_indices = @transform_2, window_bounds = array<i64: 4, 256>}, {transform_indices = @transform_3, window_bounds = array<i64: 8, 1>}, {pipeline_mode = #tpu.pipeline_mode<synchronous>, transform_indices = @transform_4, window_bounds = array<i64: 1, 1>}]} {
    %c0_i32 = arith.constant 0 : i32
    %0 = arith.cmpi eq, %arg0, %c0_i32 : i32
    %1 = arith.extui %0 : i1 to i32
    %c0_i32_0 = arith.constant 0 : i32
    %2 = arith.cmpi ne, %1, %c0_i32_0 : i32
    scf.if %2 {
      %cst_37 = arith.constant 0.000000e+00 : f32
      %105 = vector.broadcast %cst_37 : f32 to vector<8x1xf32>
      %c0_38 = arith.constant 0 : index
      %c0_39 = arith.constant 0 : index
      %106 = vector.load %arg6[%c0_38, %c0_39] : memref<8x1xf32, #tpu.memory_space<vmem>>, vector<8x1xf32>
      tpu.vector_store %arg6[%c0_38, %c0_39], %105 {strides = array<i32>} : memref<8x1xf32, #tpu.memory_space<vmem>>, vector<8x1xf32>,
    } else {
    }
    %c0 = arith.constant 0 : index
    %c0_1 = arith.constant 0 : index
    %3 = vector.load %arg3[%c0, %c0_1] : memref<4x256xf32, #tpu.memory_space<vmem>>, vector<1x256xf32>
    %c1 = arith.constant 1 : index
    %c0_2 = arith.constant 0 : index
    %4 = vector.load %arg3[%c1, %c0_2] : memref<4x256xf32, #tpu.memory_space<vmem>>, vector<1x256xf32>
    %c2 = arith.constant 2 : index
    %c0_3 = arith.constant 0 : index
    %5 = vector.load %arg3[%c2, %c0_3] : memref<4x256xf32, #tpu.memory_space<vmem>>, vector<1x256xf32>
    %c3 = arith.constant 3 : index
    %c0_4 = arith.constant 0 : index
    %6 = vector.load %arg3[%c3, %c0_4] : memref<4x256xf32, #tpu.memory_space<vmem>>, vector<1x256xf32>
    %c0_5 = arith.constant 0 : index
    %c0_6 = arith.constant 0 : index
    %7 = vector.load %arg1[%c0_5, %c0_6] : memref<8x256xf32, #tpu.memory_space<vmem>>, vector<8x256xf32>
    %c16_i32 = arith.constant 16 : i32
    %8 = tpu.dynamic_rotate %7 by %c16_i32 dim 1 : vector<8x256xf32>, i32 -> vector<8x256xf32>
    %9 = vector.broadcast %5 : vector<1x256xf32> to vector<8x256xf32>
    %10 = arith.mulf %8, %9 : vector<8x256xf32>
    %c240_i32 = arith.constant 240 : i32
    %11 = tpu.dynamic_rotate %7 by %c240_i32 dim 1 : vector<8x256xf32>, i32 -> vector<8x256xf32>
    %12 = vector.broadcast %6 : vector<1x256xf32> to vector<8x256xf32>
    %13 = arith.mulf %11, %12 : vector<8x256xf32>
    %c1_i32 = arith.constant 1 : i32
    %14 = tpu.dynamic_rotate %7 by %c1_i32 dim 1 : vector<8x256xf32>, i32 -> vector<8x256xf32>
    %15 = vector.broadcast %3 : vector<1x256xf32> to vector<8x256xf32>
    %16 = arith.mulf %14, %15 : vector<8x256xf32>
    %c255_i32 = arith.constant 255 : i32
    %17 = tpu.dynamic_rotate %7 by %c255_i32 dim 1 : vector<8x256xf32>, i32 -> vector<8x256xf32>
    %18 = vector.broadcast %4 : vector<1x256xf32> to vector<8x256xf32>
    %19 = arith.mulf %17, %18 : vector<8x256xf32>
    %20 = arith.addf %10, %7 : vector<8x256xf32>
    %21 = arith.addf %20, %13 : vector<8x256xf32>
    %22 = arith.addf %16, %7 : vector<8x256xf32>
    %23 = arith.addf %22, %19 : vector<8x256xf32>
    %c1_i32_7 = arith.constant 1 : i32
    %24 = tpu.dynamic_rotate %21 by %c1_i32_7 dim 1 : vector<8x256xf32>, i32 -> vector<8x256xf32>
    %25 = vector.broadcast %3 : vector<1x256xf32> to vector<8x256xf32>
    %26 = arith.mulf %24, %25 : vector<8x256xf32>
    %c255_i32_8 = arith.constant 255 : i32
    %27 = tpu.dynamic_rotate %21 by %c255_i32_8 dim 1 : vector<8x256xf32>, i32 -> vector<8x256xf32>
    %28 = vector.broadcast %4 : vector<1x256xf32> to vector<8x256xf32>
    %29 = arith.mulf %27, %28 : vector<8x256xf32>
    %30 = arith.subf %26, %29 : vector<8x256xf32>
    %c16_i32_9 = arith.constant 16 : i32
    %31 = tpu.dynamic_rotate %23 by %c16_i32_9 dim 1 : vector<8x256xf32>, i32 -> vector<8x256xf32>
    %32 = vector.broadcast %5 : vector<1x256xf32> to vector<8x256xf32>
    %33 = arith.mulf %31, %32 : vector<8x256xf32>
    %c240_i32_10 = arith.constant 240 : i32
    %34 = tpu.dynamic_rotate %23 by %c240_i32_10 dim 1 : vector<8x256xf32>, i32 -> vector<8x256xf32>
    %35 = vector.broadcast %6 : vector<1x256xf32> to vector<8x256xf32>
    %36 = arith.mulf %34, %35 : vector<8x256xf32>
    %37 = arith.subf %33, %36 : vector<8x256xf32>
    %38 = arith.mulf %30, %30 : vector<8x256xf32>
    %39 = arith.mulf %37, %37 : vector<8x256xf32>
    %40 = arith.addf %38, %39 : vector<8x256xf32>
    %cst = arith.constant 0.111111112 : f32
    %41 = vector.broadcast %cst : f32 to vector<8x256xf32>
    %42 = arith.mulf %40, %41 : vector<8x256xf32>
    %cst_11 = arith.constant 9.99999996E-13 : f32
    %43 = vector.broadcast %cst_11 : f32 to vector<8x256xf32>
    %44 = arith.addf %42, %43 : vector<8x256xf32>
    %c0_12 = arith.constant 0 : index
    %c0_13 = arith.constant 0 : index
    %45 = vector.load %arg2[%c0_12, %c0_13] : memref<8x256xf32, #tpu.memory_space<vmem>>, vector<8x256xf32>
    %c16_i32_14 = arith.constant 16 : i32
    %46 = tpu.dynamic_rotate %45 by %c16_i32_14 dim 1 : vector<8x256xf32>, i32 -> vector<8x256xf32>
    %47 = vector.broadcast %5 : vector<1x256xf32> to vector<8x256xf32>
    %48 = arith.mulf %46, %47 : vector<8x256xf32>
    %c240_i32_15 = arith.constant 240 : i32
    %49 = tpu.dynamic_rotate %45 by %c240_i32_15 dim 1 : vector<8x256xf32>, i32 -> vector<8x256xf32>
    %50 = vector.broadcast %6 : vector<1x256xf32> to vector<8x256xf32>
    %51 = arith.mulf %49, %50 : vector<8x256xf32>
    %c1_i32_16 = arith.constant 1 : i32
    %52 = tpu.dynamic_rotate %45 by %c1_i32_16 dim 1 : vector<8x256xf32>, i32 -> vector<8x256xf32>
    %53 = vector.broadcast %3 : vector<1x256xf32> to vector<8x256xf32>
    %54 = arith.mulf %52, %53 : vector<8x256xf32>
    %c255_i32_17 = arith.constant 255 : i32
    %55 = tpu.dynamic_rotate %45 by %c255_i32_17 dim 1 : vector<8x256xf32>, i32 -> vector<8x256xf32>
    %56 = vector.broadcast %4 : vector<1x256xf32> to vector<8x256xf32>
    %57 = arith.mulf %55, %56 : vector<8x256xf32>
    %58 = arith.addf %48, %45 : vector<8x256xf32>
    %59 = arith.addf %58, %51 : vector<8x256xf32>
    %60 = arith.addf %54, %45 : vector<8x256xf32>
    %61 = arith.addf %60, %57 : vector<8x256xf32>
    %c1_i32_18 = arith.constant 1 : i32
    %62 = tpu.dynamic_rotate %59 by %c1_i32_18 dim 1 : vector<8x256xf32>, i32 -> vector<8x256xf32>
    %63 = vector.broadcast %3 : vector<1x256xf32> to vector<8x256xf32>
    %64 = arith.mulf %62, %63 : vector<8x256xf32>
    %c255_i32_19 = arith.constant 255 : i32
    %65 = tpu.dynamic_rotate %59 by %c255_i32_19 dim 1 : vector<8x256xf32>, i32 -> vector<8x256xf32>
    %66 = vector.broadcast %4 : vector<1x256xf32> to vector<8x256xf32>
    %67 = arith.mulf %65, %66 : vector<8x256xf32>
    %68 = arith.subf %64, %67 : vector<8x256xf32>
    %c16_i32_20 = arith.constant 16 : i32
    %69 = tpu.dynamic_rotate %61 by %c16_i32_20 dim 1 : vector<8x256xf32>, i32 -> vector<8x256xf32>
    %70 = vector.broadcast %5 : vector<1x256xf32> to vector<8x256xf32>
    %71 = arith.mulf %69, %70 : vector<8x256xf32>
    %c240_i32_21 = arith.constant 240 : i32
    %72 = tpu.dynamic_rotate %61 by %c240_i32_21 dim 1 : vector<8x256xf32>, i32 -> vector<8x256xf32>
    %73 = vector.broadcast %6 : vector<1x256xf32> to vector<8x256xf32>
    %74 = arith.mulf %72, %73 : vector<8x256xf32>
    %75 = arith.subf %71, %74 : vector<8x256xf32>
    %76 = arith.mulf %68, %68 : vector<8x256xf32>
    %77 = arith.mulf %75, %75 : vector<8x256xf32>
    %78 = arith.addf %76, %77 : vector<8x256xf32>
    %cst_22 = arith.constant 0.111111112 : f32
    %79 = vector.broadcast %cst_22 : f32 to vector<8x256xf32>
    %80 = arith.mulf %78, %79 : vector<8x256xf32>
    %cst_23 = arith.constant 9.99999996E-13 : f32
    %81 = vector.broadcast %cst_23 : f32 to vector<8x256xf32>
    %82 = arith.addf %80, %81 : vector<8x256xf32>
    %83 = arith.mulf %44, %82 : vector<8x256xf32>
    %84 = math.sqrt %83 : vector<8x256xf32>
    %cst_24 = arith.constant 2.000000e+00 : f32
    %85 = vector.broadcast %cst_24 : f32 to vector<8x256xf32>
    %86 = arith.mulf %85, %84 : vector<8x256xf32>
    %cst_25 = arith.constant 2.600000e-03 : f32
    %87 = vector.broadcast %cst_25 : f32 to vector<8x256xf32>
    %88 = arith.addf %86, %87 : vector<8x256xf32>
    %89 = arith.addf %44, %82 : vector<8x256xf32>
    %cst_26 = arith.constant 2.600000e-03 : f32
    %90 = vector.broadcast %cst_26 : f32 to vector<8x256xf32>
    %91 = arith.addf %89, %90 : vector<8x256xf32>
    %cst_27 = arith.constant 9.99999996E-13 : f32
    %92 = vector.broadcast %cst_27 : f32 to vector<8x256xf32>
    %93 = arith.addf %91, %92 : vector<8x256xf32>
    %94 = arith.divf %88, %93 : vector<8x256xf32>
    %c0_28 = arith.constant 0 : index
    %c0_29 = arith.constant 0 : index
    %95 = vector.load %arg6[%c0_28, %c0_29] : memref<8x1xf32, #tpu.memory_space<vmem>>, vector<8x1xf32>
    %cst_30 = arith.constant dense<0.000000e+00> : vector<8xf32>
    %96 = vector.multi_reduction <add>, %94, %cst_30 [1] : vector<8x256xf32> to vector<8xf32>
    %97 = vector.shape_cast %96 : vector<8xf32> to vector<8x1xf32>
    %c0_31 = arith.constant 0 : index
    %c0_32 = arith.constant 0 : index
    %98 = vector.load %arg4[%c0_31, %c0_32] : memref<8x1xf32, #tpu.memory_space<vmem>>, vector<8x1xf32>
    %99 = arith.mulf %97, %98 : vector<8x1xf32>
    %100 = arith.addf %95, %99 : vector<8x1xf32>
    %c0_33 = arith.constant 0 : index
    %c0_34 = arith.constant 0 : index
    %101 = vector.load %arg6[%c0_33, %c0_34] : memref<8x1xf32, #tpu.memory_space<vmem>>, vector<8x1xf32>
    tpu.vector_store %arg6[%c0_33, %c0_34], %100 {strides = array<i32>} : memref<8x1xf32, #tpu.memory_space<vmem>>, vector<8x1xf32>,
    %c0_i32_35 = arith.constant 0 : i32
    %102 = arith.cmpi eq, %arg0, %c0_i32_35 : i32
    %103 = arith.extui %102 : i1 to i32
    %c0_i32_36 = arith.constant 0 : i32
    %104 = arith.cmpi ne, %103, %c0_i32_36 : i32
    scf.if %104 {
      %c0_37 = arith.constant 0 : index
      %c0_38 = arith.constant 0 : index
      %105 = vector.load %arg6[%c0_37, %c0_38] : memref<8x1xf32, #tpu.memory_space<vmem>>, vector<8x1xf32>
      %106 = vector.shape_cast %105 : vector<8x1xf32> to vector<1x8x1xf32>
      %cst_39 = arith.constant dense<0.000000e+00> : vector<1xf32>
      %107 = vector.multi_reduction <add>, %106, %cst_39 [1, 2] : vector<1x8x1xf32> to vector<1xf32>
      %108 = vector.shape_cast %107 : vector<1xf32> to vector<1x1x1xf32>
      %109 = vector.extract %108[0, 0, 0] : f32 from vector<1x1x1xf32>
      %cst_40 = arith.constant 2.048000e+03 : f32
      %110 = arith.divf %109, %cst_40 : f32
      %cst_41 = arith.constant 1.000000e+00 : f32
      %111 = arith.subf %cst_41, %110 : f32
      %112 = vector.broadcast %111 : f32 to vector<1x1xf32>
      %c0_42 = arith.constant 0 : index
      %c0_43 = arith.constant 0 : index
      %113 = vector.load %arg5[%c0_42, %c0_43] : memref<1x1xf32, #tpu.memory_space<vmem>>, vector<1x1xf32>
      tpu.vector_store %arg5[%c0_42, %c0_43], %112 {strides = array<i32>} : memref<1x1xf32, #tpu.memory_space<vmem>>, vector<1x1xf32>,
    } else {
    }
    return
  }
  func.func @transform_0(%arg0: i32) -> (i32, i32) {
    %c0_i32 = arith.constant 0 : i32
    %c0_i32_0 = arith.constant 0 : i32
    return %arg0, %c0_i32 : i32, i32
  }
  func.func @transform_1(%arg0: i32) -> (i32, i32) {
    %c0_i32 = arith.constant 0 : i32
    %c0_i32_0 = arith.constant 0 : i32
    return %arg0, %c0_i32 : i32, i32
  }
  func.func @transform_2(%arg0: i32) -> (i32, i32) {
    %c0_i32 = arith.constant 0 : i32
    %c0_i32_0 = arith.constant 0 : i32
    %c0_i32_1 = arith.constant 0 : i32
    return %c0_i32, %c0_i32_0 : i32, i32
  }
  func.func @transform_3(%arg0: i32) -> (i32, i32) {
    %c0_i32 = arith.constant 0 : i32
    %c0_i32_0 = arith.constant 0 : i32
    return %arg0, %c0_i32 : i32, i32
  }
  func.func @transform_4(%arg0: i32) -> (i32, i32) {
    %c0_i32 = arith.constant 0 : i32
    %c0_i32_0 = arith.constant 0 : i32
    %c0_i32_1 = arith.constant 0 : i32
    return %c0_i32, %c0_i32_0 : i32, i32
  }
}

</mosaic_0001>

<llo_original>
// kernel: gms_loss.1
$region0: #{gms_loss.1}
  #allocation0 [shape = 'u32[]', space=smem, size = 0x4, offset = 0x4, fixed_abs, tag = 'smem constant byte address 0x4 - core index']
  #allocation1 [shape = 'u32[72,128]{1,0:T(1,128)}', space=vmem, size = 0x9000, scoped, tag = 'internal scratch']
  #allocation2 [shape = 'f32[8,1]{1,0:T(8,128)}', space=vmem, size = 0x1000, scoped, tag = 'scratch operand']
  %s0 = inlined_call_operand.vmem [shape: f32[8,256], index: 0, kind: input, shape index: {}]
  %s1 = inlined_call_operand.vmem [shape: f32[8,256], index: 1, kind: input, shape index: {}]
  %s2 = inlined_call_operand.vmem [shape: f32[4,256], index: 2, kind: input, shape index: {}]
  %s3 = inlined_call_operand.vmem [shape: f32[8,1], index: 3, kind: input, shape index: {}]
  %s4 = inlined_call_operand.hbm [shape: f32[1,1], index: 4, kind: output, shape index: {}]
  %s5 = sld [smem:[#allocation0]]
  $region34: #{gms_loss.1} parent=0
    _
  %s7 = ssub.s32 1, %s5
  %s8 = scalar_select 0, %s7, %s5
  $region1: #{gms_loss.1} parent=0
    #allocation3 [shape = 'u8[512]{0}', space=vmem, size = 0x400, scoped, tag = 'output window, operand 0, single buffered']
    #allocation4 [shape = 's32[1]{0}', space=sflag, size = 0x4, scoped, tag = 'scoped memory for gms_loss.1']
    %9 = vsyncpa [#allocation4], 0
    // Predicated region
    $region2: #{gms_loss.1} parent=1 // pred_check
      _
    $region3: #{gms_loss.1} parent=1 // pred_check_branch
      %11 = sbr.rel (0) target = $region5
    $region4: #{gms_loss.1} parent=1 // pred_region
      _
    $region5: #{gms_loss.1} parent=1 // pred_fallthru
      _
    // Predicated region
    $region6: #{gms_loss.1} parent=1 // pred_check
      _
    $region7: #{gms_loss.1} parent=1 // pred_check_branch
      %13 = sbr.rel (0) target = $region9
    $region8: #{gms_loss.1} parent=1 // pred_region
      _
    $region9: #{gms_loss.1} parent=1 // pred_fallthru
      _
    // Predicated region
    $region10: #{gms_loss.1} parent=1 // pred_check
      _
    $region11: #{gms_loss.1} parent=1 // pred_check_branch
      %15 = sbr.rel (0) target = $region13
    $region12: #{gms_loss.1} parent=1 // pred_region
      _
    $region13: #{gms_loss.1} parent=1 // pred_fallthru
      _
    // Predicated region
    $region14: #{gms_loss.1} parent=1 // pred_check
      _
    $region15: #{gms_loss.1} parent=1 // pred_check_branch
      %17 = sbr.rel (0) target = $region17
    $region16: #{gms_loss.1} parent=1 // pred_region
      _
    $region17: #{gms_loss.1} parent=1 // pred_fallthru
      _
    %p18 = scmp.eq.s32.totalorder 0, 0
    // Predicated region
    $region18: #{gms_loss.1} parent=1 // pred_check
      %p19 = pneg %p18
    $region19: #{gms_loss.1} parent=1 // pred_check_branch
      %21 = sbr.rel (%p19) target = $region21
    $region20: #{gms_loss.1} parent=1 // pred_region
      %vm22 = vcmask 7168
      %23 = vst.msk [vmem:[#allocation2] sm:$0xff] %vm22, 0.0
    $region21: #{gms_loss.1} parent=1 // pred_fallthru
      _
    %v24 = vld [vmem:[%s2] ss:$4 sm:$0x3]
    %s25 = scalar_lea.vmem %s2, 1
    %v26 = vld [vmem:[%s25] ss:$4 sm:$0x3]
    %s27 = scalar_lea.vmem %s2, 2
    %v28 = vld [vmem:[%s27] ss:$4 sm:$0x3]
    %s29 = scalar_lea.vmem %s2, 3
    %v30 = vld [vmem:[%s29] ss:$4 sm:$0x3]
    %v31 = vld [vmem:[%s0] sm:$0xff]
    %v32 = vld [vmem:[%s0 + $0x8] sm:$0xff]
    %33 = vrot.lane.b32.xlu0 %v31, 16
    %v34 = vpop.permute.xlu0 %33
    %35 = vrot.lane.b32.xlu0 %v32, 16
    %v36 = vpop.permute.xlu0 %35
    %v37 = vlaneseq
    %v38 = vand.u32 %v37, 127
    %vm39 = vcmp.lt.s32.totalorder %v38, 16
    %v40 = vsel %vm39, %v34, %v36
    %v41 = vsel %vm39, %v36, %v34
    %v43 = vperm.slane %v28, 0
    %v44 = vperm.slane %v28, 1
    %v47 = vmul.f32 %v41, %v43
    %v48 = vmul.f32 %v40, %v44
    %49 = vrot.lane.b32.xlu0 %v31, 112
    %v50 = vpop.permute.xlu0 %49
    %51 = vrot.lane.b32.xlu0 %v32, 112
    %v52 = vpop.permute.xlu0 %51
    %vm53 = vcmp.lt.s32.totalorder %v38, 112
    %v54 = vsel %vm53, %v50, %v52
    %v55 = vsel %vm53, %v52, %v50
    %v57 = vperm.slane %v30, 0
    %v58 = vperm.slane %v30, 1
    %v61 = vmul.f32 %v54, %v57
    %v62 = vmul.f32 %v55, %v58
    %63 = vrot.lane.b32.xlu0 %v31, 1
    %v64 = vpop.permute.xlu0 %63
    %65 = vrot.lane.b32.xlu0 %v32, 1
    %v66 = vpop.permute.xlu0 %65
    %vm67 = vcmp.lt.s32.totalorder %v38, 1
    %v68 = vsel %vm67, %v64, %v66
    %v69 = vsel %vm67, %v66, %v64
    %v71 = vperm.slane %v24, 0
    %v72 = vperm.slane %v24, 1
    %v75 = vmul.f32 %v69, %v71
    %v76 = vmul.f32 %v68, %v72
    %77 = vrot.lane.b32.xlu0 %v31, 127
    %v78 = vpop.permute.xlu0 %77
    %79 = vrot.lane.b32.xlu0 %v32, 127
    %v80 = vpop.permute.xlu0 %79
    %vm81 = vcmp.lt.s32.totalorder %v38, 127
    %v82 = vsel %vm81, %v78, %v80
    %v83 = vsel %vm81, %v80, %v78
    %v85 = vperm.slane %v26, 0
    %v86 = vperm.slane %v26, 1
    %v89 = vmul.f32 %v82, %v85
    %v90 = vmul.f32 %v83, %v86
    %v91 = vadd.f32 %v47, %v31
    %v92 = vadd.f32 %v48, %v32
    %v93 = vadd.f32 %v91, %v61
    %v94 = vadd.f32 %v92, %v62
    %v95 = vadd.f32 %v75, %v31
    %v96 = vadd.f32 %v76, %v32
    %v97 = vadd.f32 %v95, %v89
    %v98 = vadd.f32 %v96, %v90
    %99 = vrot.lane.b32.xlu0 %v93, 1
    %v100 = vpop.permute.xlu0 %99
    %101 = vrot.lane.b32.xlu0 %v94, 1
    %v102 = vpop.permute.xlu0 %101
    %v103 = vsel %vm67, %v100, %v102
    %v104 = vsel %vm67, %v102, %v100
    %v105 = vmul.f32 %v104, %v71
    %v106 = vmul.f32 %v103, %v72
    %107 = vrot.lane.b32.xlu0 %v93, 127
    %v108 = vpop.permute.xlu0 %107
    %109 = vrot.lane.b32.xlu0 %v94, 127
    %v110 = vpop.permute.xlu0 %109
    %v111 = vsel %vm81, %v108, %v110
    %v112 = vsel %vm81, %v110, %v108
    %v113 = vmul.f32 %v111, %v85
    %v114 = vmul.f32 %v112, %v86
    %v115 = vsub.f32 %v105, %v113
    %v116 = vsub.f32 %v106, %v114
    %117 = vrot.lane.b32.xlu0 %v97, 16
    %v118 = vpop.permute.xlu0 %117
    %119 = vrot.lane.b32.xlu0 %v98, 16
    %v120 = vpop.permute.xlu0 %119
    %v121 = vsel %vm39, %v118, %v120
    %v122 = vsel %vm39, %v120, %v118
    %v123 = vmul.f32 %v122, %v43
    %v124 = vmul.f32 %v121, %v44
    %125 = vrot.lane.b32.xlu0 %v97, 112
    %v126 = vpop.permute.xlu0 %125
    %127 = vrot.lane.b32.xlu0 %v98, 112
    %v128 = vpop.permute.xlu0 %127
    %v129 = vsel %vm53, %v126, %v128
    %v130 = vsel %vm53, %v128, %v126
    %v131 = vmul.f32 %v129, %v57
    %v132 = vmul.f32 %v130, %v58
    %v133 = vsub.f32 %v123, %v131
    %v134 = vsub.f32 %v124, %v132
    %v135 = vmul.f32 %v115, %v115
    %v136 = vmul.f32 %v116, %v116
    %v137 = vmul.f32 %v133, %v133
    %v138 = vmul.f32 %v134, %v134
    %v139 = vadd.f32 %v135, %v137
    %v140 = vadd.f32 %v136, %v138
    %v141 = vmul.f32 %v139, 0.11111111
    %v142 = vmul.f32 %v140, 0.11111111
    %v143 = vadd.f32 %v141, 1e-12
    %v144 = vadd.f32 %v142, 1e-12
    %v145 = vld [vmem:[%s1] sm:$0xff]
    %v146 = vld [vmem:[%s1 + $0x8] sm:$0xff]
    %147 = vrot.lane.b32.xlu0 %v145, 16
    %v148 = vpop.permute.xlu0 %147
    %149 = vrot.lane.b32.xlu0 %v146, 16
    %v150 = vpop.permute.xlu0 %149
    %v151 = vsel %vm39, %v148, %v150
    %v152 = vsel %vm39, %v150, %v148
    %v153 = vmul.f32 %v152, %v43
    %v154 = vmul.f32 %v151, %v44
    %155 = vrot.lane.b32.xlu0 %v145, 112
    %v156 = vpop.permute.xlu0 %155
    %157 = vrot.lane.b32.xlu0 %v146, 112
    %v158 = vpop.permute.xlu0 %157
    %v159 = vsel %vm53, %v156, %v158
    %v160 = vsel %vm53, %v158, %v156
    %v161 = vmul.f32 %v159, %v57
    %v162 = vmul.f32 %v160, %v58
    %163 = vrot.lane.b32.xlu0 %v145, 1
    %v164 = vpop.permute.xlu0 %163
    %165 = vrot.lane.b32.xlu0 %v146, 1
    %v166 = vpop.permute.xlu0 %165
    %v167 = vsel %vm67, %v164, %v166
    %v168 = vsel %vm67, %v166, %v164
    %v169 = vmul.f32 %v168, %v71
    %v170 = vmul.f32 %v167, %v72
    %171 = vrot.lane.b32.xlu0 %v145, 127
    %v172 = vpop.permute.xlu0 %171
    %173 = vrot.lane.b32.xlu0 %v146, 127
    %v174 = vpop.permute.xlu0 %173
    %v175 = vsel %vm81, %v172, %v174
    %v176 = vsel %vm81, %v174, %v172
    %v177 = vmul.f32 %v175, %v85
    %v178 = vmul.f32 %v176, %v86
    %v179 = vadd.f32 %v153, %v145
    %v180 = vadd.f32 %v154, %v146
    %v181 = vadd.f32 %v179, %v161
    %v182 = vadd.f32 %v180, %v162
    %v183 = vadd.f32 %v169, %v145
    %v184 = vadd.f32 %v170, %v146
    %v185 = vadd.f32 %v183, %v177
    %v186 = vadd.f32 %v184, %v178
    %187 = vrot.lane.b32.xlu0 %v181, 1
    %v188 = vpop.permute.xlu0 %187
    %189 = vrot.lane.b32.xlu0 %v182, 1
    %v190 = vpop.permute.xlu0 %189
    %v191 = vsel %vm67, %v188, %v190
    %v192 = vsel %vm67, %v190, %v188
    %v193 = vmul.f32 %v192, %v71
    %v194 = vmul.f32 %v191, %v72
    %195 = vrot.lane.b32.xlu0 %v181, 127
    %v196 = vpop.permute.xlu0 %195
    %197 = vrot.lane.b32.xlu0 %v182, 127
    %v198 = vpop.permute.xlu0 %197
    %v199 = vsel %vm81, %v196, %v198
    %v200 = vsel %vm81, %v198, %v196
    %v201 = vmul.f32 %v199, %v85
    %v202 = vmul.f32 %v200, %v86
    %v203 = vsub.f32 %v193, %v201
    %v204 = vsub.f32 %v194, %v202
    %205 = vrot.lane.b32.xlu0 %v185, 16
    %v206 = vpop.permute.xlu0 %205
    %207 = vrot.lane.b32.xlu0 %v186, 16
    %v208 = vpop.permute.xlu0 %207
    %v209 = vsel %vm39, %v206, %v208
    %v210 = vsel %vm39, %v208, %v206
    %v211 = vmul.f32 %v210, %v43
    %v212 = vmul.f32 %v209, %v44
    %213 = vrot.lane.b32.xlu0 %v185, 112
    %v214 = vpop.permute.xlu0 %213
    %215 = vrot.lane.b32.xlu0 %v186, 112
    %v216 = vpop.permute.xlu0 %215
    %v217 = vsel %vm53, %v214, %v216
    %v218 = vsel %vm53, %v216, %v214
    %v219 = vmul.f32 %v217, %v57
    %v220 = vmul.f32 %v218, %v58
    %v221 = vsub.f32 %v211, %v219
    %v222 = vsub.f32 %v212, %v220
    %v223 = vmul.f32 %v203, %v203
    %v224 = vmul.f32 %v204, %v204
    %v225 = vmul.f32 %v221, %v221
    %v226 = vmul.f32 %v222, %v222
    %v227 = vadd.f32 %v223, %v225
    %v228 = vadd.f32 %v224, %v226
    %v229 = vmul.f32 %v227, 0.11111111
    %v230 = vmul.f32 %v228, 0.11111111
    %v231 = vadd.f32 %v229, 1e-12
    %v232 = vadd.f32 %v230, 1e-12
    %v233 = vmul.f32 %v143, %v231
    %v234 = vmul.f32 %v144, %v232
    %v235 = vrsqrt.pop %v233
    %v236 = vmul.f32 %v235, %v233
    %v237 = vmul.f32 %v236, %v235
    %v238 = vmul.f32 0.5, %v237
    %v239 = vsub.f32 1.5, %v238
    %v240 = vmul.f32 %v235, %v239
    %v241 = vmul.f32 %v233, %v240
    %vm242 = vcmp.eq.f32.partialorder %v233, inf
    %v243 = vsel %vm242, %v233, %v241
    %vm244 = vcmp.eq.f32.partialorder %v233, 0.0
    %v245 = vand.u32 %v233, 2147483648
    %v246 = vsel %vm244, %v245, %v243
    %v247 = vrsqrt.pop %v234
    %v248 = vmul.f32 %v247, %v234
    %v249 = vmul.f32 %v248, %v247
    %v250 = vmul.f32 0.5, %v249
    %v251 = vsub.f32 1.5, %v250
    %v252 = vmul.f32 %v247, %v251
    %v253 = vmul.f32 %v234, %v252
    %vm254 = vcmp.eq.f32.partialorder %v234, inf
    %v255 = vsel %vm254, %v234, %v253
    %vm256 = vcmp.eq.f32.partialorder %v234, 0.0
    %v257 = vand.u32 %v234, 2147483648
    %v258 = vsel %vm256, %v257, %v255
    %v259 = vmul.f32 %v246, 2.0
    %v260 = vmul.f32 %v258, 2.0
    %v261 = vadd.f32 %v259, 0.0026
    %v262 = vadd.f32 %v260, 0.0026
    %v263 = vadd.f32 %v143, %v231
    %v264 = vadd.f32 %v144, %v232
    %v265 = vadd.f32 %v263, 0.0026
    %v266 = vadd.f32 %v264, 0.0026
    %v267 = vadd.f32 %v265, 1e-12
    %v268 = vadd.f32 %v266, 1e-12
    %v269 = vrcp.pop %v267
    %v270 = vmul.f32 %v267, %v269
    %v271 = vsub.f32 1.0, %v270
    %v272 = vmul.f32 %v269, %v271
    %v273 = vadd.f32 %v269, %v272
    %vm274 = vweird.f32 %v267
    %vm275 = vweird.f32 %v269
    %vm276 = vmor %vm274, %vm275
    %v277 = vsel %vm276, %v269, %v273
    %v278 = vand.u32 2147483647, %v267
    %vm279 = vcmp.eq.f32.partialorder %v278, 8.507059e+37
    %v280 = vand.u32 %v267, 2147483648
    %v281 = vor.u32 1.1754944e-38, %v280
    %v282 = vsel %vm279, %v281, %v277
    %v283 = vmul.f32 %v261, %v282
    %v284 = vrcp.pop %v268
    %v285 = vmul.f32 %v268, %v284
    %v286 = vsub.f32 1.0, %v285
    %v287 = vmul.f32 %v284, %v286
    %v288 = vadd.f32 %v284, %v287
    %vm289 = vweird.f32 %v268
    %vm290 = vweird.f32 %v284
    %vm291 = vmor %vm289, %vm290
    %v292 = vsel %vm291, %v284, %v288
    %v293 = vand.u32 2147483647, %v268
    %vm294 = vcmp.eq.f32.partialorder %v293, 8.507059e+37
    %v295 = vand.u32 %v268, 2147483648
    %v296 = vor.u32 1.1754944e-38, %v295
    %v297 = vsel %vm294, %v296, %v292
    %v298 = vmul.f32 %v262, %v297
    %v299 = vld [vmem:[#allocation2] sm:$0xff]
    %v300 = vadd.f32 %v283, %v298
    %301 = vadd.xlane.f32.xlu0 %v300
    %v302 = vpop.xlane.xlu0 %301
    %v303 = vld [vmem:[%s3] sm:$0xff]
    %v304 = vmul.f32 %v302, %v303
    %v305 = vadd.f32 %v299, %v304
    %vm306 = vcmask 7168
    %307 = vst.msk [vmem:[#allocation2] sm:$0xff] %vm306, %v305
    // Predicated region
    $region22: #{gms_loss.1} parent=1 // pred_check
      %p308 = pneg %p18
    $region23: #{gms_loss.1} parent=1 // pred_check_branch
      %310 = sbr.rel (%p308) target = $region25
    $region24: #{gms_loss.1} parent=1 // pred_region
      %v311 = vld [vmem:[#allocation2] sm:$0xff]
      %v312 = vsel %vm306, %v311, 0.0
      %313 = vadd.xlane.f32.xlu0 %v312
      %v314 = vpop.xlane.xlu0 %313
      %v315 = vrot.slane %v314, 4
      %v316 = vadd.f32 %v314, %v315
      %v317 = vrot.slane %v316, 2
      %v318 = vadd.f32 %v316, %v317
      %v319 = vrot.slane %v318, 1
      %v320 = vadd.f32 %v318, %v319
      %s321 = vtos %v320
      %v322 = vrcp.pop 2048.0
      %v323 = vmul.f32 2048.0, %v322
      %v324 = vsub.f32 1.0, %v323
      %v325 = vmul.f32 %v322, %v324
      %v326 = vadd.f32 %v322, %v325
      %vm327 = vweird.f32 %v322
      %v328 = vsel %vm327, %v322, %v326
      %s329 = vtos %v328
      %s330 = smul.f32 %s321, %s329
      %s331 = ssub.f32 1.0, %s330
      %v332 = vstv %s331
      %vm333 = vcmask 0
      %334 = vst.msk [vmem:[#allocation3] sm:$0x1] %vm333, %v332
    $region25: #{gms_loss.1} parent=1 // pred_fallthru
      _
    // Predicated region
    $region26: #{gms_loss.1} parent=1 // pred_check
      _
    $region27: #{gms_loss.1} parent=1 // pred_check_branch
      %336 = sbr.rel (0) target = $region29
    $region28: #{gms_loss.1} parent=1 // pred_region
      %338 = vsyncadd [#allocation4], 0
      %s340 = sshll.u32 [#allocation3], 4
      %s341 = int_to_ptr.vmem [resolvable:$true] %s340
      %s342 = sshll.u32 %s4, 4
      %s343 = int_to_ptr.hbm [resolvable:$true] %s342
      %345 = dma.vmem_to_hbm [thread:$0]  %s341, 16, %s343, [#allocation4]
    $region29: #{gms_loss.1} parent=1 // pred_fallthru
      _
    // Predicated region
    $region30: #{gms_loss.1} parent=1 // pred_check
      _
    $region31: #{gms_loss.1} parent=1 // pred_check_branch
      %347 = sbr.rel (0) target = $region33
    $region32: #{gms_loss.1} parent=1 // pred_region
      %349 = dma.done [#allocation4], 16
    $region33: #{gms_loss.1} parent=1 // pred_fallthru
      _
    %350 = vsyncpa [#allocation4], 1

</llo_original>
